<compile_context>
chip_gen: v7x
topology: tpu7x:2x2x1
jax: 0.10.0
libtpu: 0.0.40
codegen_flags: <defaults>
</compile_context>

<pallas_src>
import jax
import jax.numpy as jnp
from jax.experimental import pallas as pl
from jax.experimental.pallas import tpu as pltpu

_LANE = 128
_SUBLANE = 8


def _round_up(n, m):
    return ((n + m - 1) // m) * m


def _make_mlp_kernel(num_layers):
    """Fused MLP kernel: refs = (x, w1, b1, w2, b2, ..., wN, bN, out)."""

    def kernel(*refs):
        x_ref = refs[0]
        o_ref = refs[-1]
        h = x_ref[...]
        for li in range(num_layers):
            w_ref = refs[1 + 2 * li]
            b_ref = refs[2 + 2 * li]
            # Standard contraction on pre-transposed (in, out) weights: (tm, in) . (in, out).
            h = jnp.dot(h.astype(w_ref.dtype), w_ref[...],
                        preferred_element_type=jnp.float32) + b_ref[...]
            if li < num_layers - 1:
                h = jnp.maximum(h, 0.0)          # ReLU between layers (not after the last)
        o_ref[...] = h.astype(o_ref.dtype)

    return kernel


def prepare_params(params, weights_dtype=jnp.float32):
    """One-time parameter preparation (call once, NOT per forward).

    * Pre-transposes each PyTorch (out, in) weight to (in_pad, out_pad) so the kernel does a
      standard A·B contraction (no in-kernel transpose).
    * Zero-pads hidden out-feature dims (and the chained in-feature dim of the next layer) to a
      multiple of 128 for lane-dense intermediates; padded rows/cols are exact zeros (ReLU(0)=0)
      so they never perturb real outputs.
    * The FINAL layer keeps its real output width (no padded HBM writeback).
    * Biases are reshaped to (1, out) for sublane broadcast and stay f32.
    * weights_dtype=jnp.bfloat16 is the bf16-MXU option (inference-grade numerics).

    NOTE: assumes each layer's in_features equals the previous layer's out_features
    (true for DynamicNet's sequential construction).
    """
    num_layers = len(params)
    prepped = []
    prev_out_pad = None
    for li, (w, b) in enumerate(params):
        out_f, in_f = w.shape
        in_pad = in_f if li == 0 else prev_out_pad
        out_pad = out_f if li == num_layers - 1 else _round_up(out_f, _LANE)
        w_t = (jnp.zeros((in_pad, out_pad), weights_dtype)
               .at[:in_f, :out_f].set(w.T.astype(weights_dtype)))
        b_p = (jnp.zeros((1, out_pad), jnp.float32)
               .at[0, :out_f].set(b.astype(jnp.float32)))
        prepped.append((w_t, b_p))
        prev_out_pad = out_pad
    return prepped


def dynamic_net_forward(x, prepped_params, max_tm=1024):
    """x: (B, input_size); prepped_params: output of prepare_params; returns (B, output_size)."""
    B, in_f = x.shape
    num_layers = len(prepped_params)
    out_f = prepped_params[-1][0].shape[1]

    # Row tile: big tiles amortize the ~0.35us/step overhead over the VMEM-resident weights,
    # but for moderate B keep >= 2 grid steps so the "parallel" axis can shard across the two
    # TensorCores on v7x. Tiny B just runs a single full-extent block.
    if B <= _SUBLANE:
        tm = B
    else:
        tm = min(max_tm, _round_up(-(-B // 2), _SUBLANE))
    grid = (pl.cdiv(B, tm),)

    def resident(a):
        # Full array, same block every grid step -> stays resident in VMEM.
        return pl.BlockSpec(a.shape, lambda i: (0, 0))

    in_specs = [pl.BlockSpec((tm, in_f), lambda i: (i, 0))]
    args = [x]
    for w, b in prepped_params:
        in_specs += [resident(w), resident(b)]
        args += [w, b]

    flops = sum(2 * B * w.shape[0] * w.shape[1] for w, _ in prepped_params)
    bytes_accessed = (x.nbytes
                      + sum(w.nbytes + b.nbytes for w, b in prepped_params)
                      + B * out_f * 4)

    # TODO(synk): if max_tm is pushed past ~1024, check the bundle dump for spills of the
    # chained (tm, 128) f32 intermediates and stage them through an explicit VMEM scratch.
    out = pl.pallas_call(
        _make_mlp_kernel(num_layers),
        out_shape=jax.ShapeDtypeStruct((B, out_f), jnp.float32),
        grid=grid,
        in_specs=in_specs,
        out_specs=pl.BlockSpec((tm, out_f), lambda i: (i, 0)),
        compiler_params=pltpu.CompilerParams(
            dimension_semantics=("parallel",)),
        cost_estimate=pl.CostEstimate(flops=int(flops), transcendentals=0,
                                      bytes_accessed=int(bytes_accessed)),
    )(*args)
    return out


def init_linear(key, in_features, out_features):
    # Deterministic init mimicking PyTorch's default uniform(-1/sqrt(in), 1/sqrt(in)).
    kw, kb = jax.random.split(key)
    bound = 1.0 / jnp.sqrt(jnp.float32(in_features))
    w = jax.random.uniform(kw, (out_features, in_features), jnp.float32, -bound, bound)
    b = jax.random.uniform(kb, (out_features,), jnp.float32, -bound, bound)
    return w, b


if __name__ == "__main__":
    # DynamicNet(input_size=32, hidden_sizes=[64, 48], output_size=16, activation_func=nn.ReLU)
    input_size = 32
    hidden_sizes = [64, 48]
    output_size = 16
    batch = 8

    key = jax.random.PRNGKey(0)
    k_x, k1, k2, k3 = jax.random.split(key, 4)

    x = jax.random.normal(k_x, (batch, input_size), jnp.float32)

    raw_params = [
        init_linear(k1, input_size, hidden_sizes[0]),
        init_linear(k2, hidden_sizes[0], hidden_sizes[1]),
        init_linear(k3, hidden_sizes[1], output_size),
    ]

    # One-time prep (out of the hot path). f32 weights keep exact nn.Linear semantics for the
    # check below; pass weights_dtype=jnp.bfloat16 for the bf16-MXU inference path.
    prepped = prepare_params(raw_params)

    out = dynamic_net_forward(x, prepped)
    out = jax.block_until_ready(out)

    # Pure-JAX reference of the original (unpadded, un-transposed) forward pass.
    h = jnp.maximum(x @ raw_params[0][0].T + raw_params[0][1], 0.0)
    h = jnp.maximum(h @ raw_params[1][0].T + raw_params[1][1], 0.0)
    ref = h @ raw_params[2][0].T + raw_params[2][1]

    assert out.shape == (batch, output_size)
    assert jnp.allclose(out, ref, atol=1e-5, rtol=1e-5)
    print("KERNEL_OK")
</pallas_src>

<mosaic_0001>
module attributes {stable_mosaic.version = 11 : i64} {
  func.func @kernel(%arg0: i32, %arg1: memref<8x32xf32, #tpu.memory_space<vmem>>, %arg2: memref<32x128xf32, #tpu.memory_space<vmem>>, %arg3: memref<1x128xf32, #tpu.memory_space<vmem>>, %arg4: memref<128x128xf32, #tpu.memory_space<vmem>>, %arg5: memref<1x128xf32, #tpu.memory_space<vmem>>, %arg6: memref<128x16xf32, #tpu.memory_space<vmem>>, %arg7: memref<1x16xf32, #tpu.memory_space<vmem>>, %arg8: memref<8x16xf32, #tpu.memory_space<vmem>>) attributes {dimension_semantics = [#tpu.dimension_semantics<parallel>], iteration_bounds = array<i64: 1>, scalar_prefetch = 0 : i64, scratch_operands = 0 : i64, tpu.core_type = #tpu.core_type<tc>, window_params = [{transform_indices = @transform_0, window_bounds = array<i64: 8, 32>}, {pipeline_mode = #tpu.pipeline_mode<synchronous>, transform_indices = @transform_1, window_bounds = array<i64: 32, 128>}, {pipeline_mode = #tpu.pipeline_mode<synchronous>, transform_indices = @transform_2, window_bounds = array<i64: 1, 128>}, {pipeline_mode = #tpu.pipeline_mode<synchronous>, transform_indices = @transform_3, window_bounds = array<i64: 128, 128>}, {pipeline_mode = #tpu.pipeline_mode<synchronous>, transform_indices = @transform_4, window_bounds = array<i64: 1, 128>}, {pipeline_mode = #tpu.pipeline_mode<synchronous>, transform_indices = @transform_5, window_bounds = array<i64: 128, 16>}, {pipeline_mode = #tpu.pipeline_mode<synchronous>, transform_indices = @transform_6, window_bounds = array<i64: 1, 16>}, {transform_indices = @transform_7, window_bounds = array<i64: 8, 16>}]} {
    %c0 = arith.constant 0 : index
    %c0_0 = arith.constant 0 : index
    %0 = vector.load %arg1[%c0, %c0_0] : memref<8x32xf32, #tpu.memory_space<vmem>>, vector<8x32xf32>
    %c0_1 = arith.constant 0 : index
    %c0_2 = arith.constant 0 : index
    %1 = vector.load %arg2[%c0_1, %c0_2] : memref<32x128xf32, #tpu.memory_space<vmem>>, vector<32x128xf32>
    %cst = arith.constant dense<0.000000e+00> : vector<8x128xf32>
    %2 = tpu.matmul %0, %1, %cst {dimension_numbers = #tpu.dot_dimension_numbers<[1], [0], [0], [1], [0, 0, 1, 1], [], []>} : vector<8x32xf32>, vector<32x128xf32>, vector<8x128xf32> -> vector<8x128xf32>
    %c0_3 = arith.constant 0 : index
    %c0_4 = arith.constant 0 : index
    %3 = vector.load %arg3[%c0_3, %c0_4] : memref<1x128xf32, #tpu.memory_space<vmem>>, vector<1x128xf32>
    %4 = vector.broadcast %3 : vector<1x128xf32> to vector<8x128xf32>
    %5 = arith.addf %2, %4 : vector<8x128xf32>
    %cst_5 = arith.constant 0.000000e+00 : f32
    %6 = vector.broadcast %cst_5 : f32 to vector<8x128xf32>
    %7 = arith.maximumf %5, %6 : vector<8x128xf32>
    %c0_6 = arith.constant 0 : index
    %c0_7 = arith.constant 0 : index
    %8 = vector.load %arg4[%c0_6, %c0_7] : memref<128x128xf32, #tpu.memory_space<vmem>>, vector<128x128xf32>
    %cst_8 = arith.constant dense<0.000000e+00> : vector<8x128xf32>
    %9 = tpu.matmul %7, %8, %cst_8 {dimension_numbers = #tpu.dot_dimension_numbers<[1], [0], [0], [1], [0, 0, 1, 1], [], []>} : vector<8x128xf32>, vector<128x128xf32>, vector<8x128xf32> -> vector<8x128xf32>
    %c0_9 = arith.constant 0 : index
    %c0_10 = arith.constant 0 : index
    %10 = vector.load %arg5[%c0_9, %c0_10] : memref<1x128xf32, #tpu.memory_space<vmem>>, vector<1x128xf32>
    %11 = vector.broadcast %10 : vector<1x128xf32> to vector<8x128xf32>
    %12 = arith.addf %9, %11 : vector<8x128xf32>
    %cst_11 = arith.constant 0.000000e+00 : f32
    %13 = vector.broadcast %cst_11 : f32 to vector<8x128xf32>
    %14 = arith.maximumf %12, %13 : vector<8x128xf32>
    %c0_12 = arith.constant 0 : index
    %c0_13 = arith.constant 0 : index
    %15 = vector.load %arg6[%c0_12, %c0_13] : memref<128x16xf32, #tpu.memory_space<vmem>>, vector<128x16xf32>
    %cst_14 = arith.constant dense<0.000000e+00> : vector<8x16xf32>
    %16 = tpu.matmul %14, %15, %cst_14 {dimension_numbers = #tpu.dot_dimension_numbers<[1], [0], [0], [1], [0, 0, 1, 1], [], []>} : vector<8x128xf32>, vector<128x16xf32>, vector<8x16xf32> -> vector<8x16xf32>
    %c0_15 = arith.constant 0 : index
    %c0_16 = arith.constant 0 : index
    %17 = vector.load %arg7[%c0_15, %c0_16] : memref<1x16xf32, #tpu.memory_space<vmem>>, vector<1x16xf32>
    %18 = vector.broadcast %17 : vector<1x16xf32> to vector<8x16xf32>
    %19 = arith.addf %16, %18 : vector<8x16xf32>
    %c0_17 = arith.constant 0 : index
    %c0_18 = arith.constant 0 : index
    %20 = vector.load %arg8[%c0_17, %c0_18] : memref<8x16xf32, #tpu.memory_space<vmem>>, vector<8x16xf32>
    tpu.vector_store %arg8[%c0_17, %c0_18], %19 {strides = array<i32>} : memref<8x16xf32, #tpu.memory_space<vmem>>, vector<8x16xf32>,
    return
  }
  func.func @transform_0(%arg0: i32) -> (i32, i32) {
    %c0_i32 = arith.constant 0 : i32
    %c0_i32_0 = arith.constant 0 : i32
    return %arg0, %c0_i32 : i32, i32
  }
  func.func @transform_1(%arg0: i32) -> (i32, i32) {
    %c0_i32 = arith.constant 0 : i32
    %c0_i32_0 = arith.constant 0 : i32
    %c0_i32_1 = arith.constant 0 : i32
    return %c0_i32, %c0_i32_0 : i32, i32
  }
  func.func @transform_2(%arg0: i32) -> (i32, i32) {
    %c0_i32 = arith.constant 0 : i32
    %c0_i32_0 = arith.constant 0 : i32
    %c0_i32_1 = arith.constant 0 : i32
    return %c0_i32, %c0_i32_0 : i32, i32
  }
  func.func @transform_3(%arg0: i32) -> (i32, i32) {
    %c0_i32 = arith.constant 0 : i32
    %c0_i32_0 = arith.constant 0 : i32
    %c0_i32_1 = arith.constant 0 : i32
    return %c0_i32, %c0_i32_0 : i32, i32
  }
  func.func @transform_4(%arg0: i32) -> (i32, i32) {
    %c0_i32 = arith.constant 0 : i32
    %c0_i32_0 = arith.constant 0 : i32
    %c0_i32_1 = arith.constant 0 : i32
    return %c0_i32, %c0_i32_0 : i32, i32
  }
  func.func @transform_5(%arg0: i32) -> (i32, i32) {
    %c0_i32 = arith.constant 0 : i32
    %c0_i32_0 = arith.constant 0 : i32
    %c0_i32_1 = arith.constant 0 : i32
    return %c0_i32, %c0_i32_0 : i32, i32
  }
  func.func @transform_6(%arg0: i32) -> (i32, i32) {
    %c0_i32 = arith.constant 0 : i32
    %c0_i32_0 = arith.constant 0 : i32
    %c0_i32_1 = arith.constant 0 : i32
    return %c0_i32, %c0_i32_0 : i32, i32
  }
  func.func @transform_7(%arg0: i32) -> (i32, i32) {
    %c0_i32 = arith.constant 0 : i32
    %c0_i32_0 = arith.constant 0 : i32
    return %arg0, %c0_i32 : i32, i32
  }
}

</mosaic_0001>

<llo_original>
// kernel: tpu_custom_call.1
$region0: #{tpu_custom_call.1}
  #allocation0 [shape = 'u32[]', space=smem, size = 0x4, offset = 0x4, fixed_abs, tag = 'smem constant byte address 0x4 - core index']
  #allocation1 [shape = 'u32[144,128]{1,0:T(1,128)}', space=vmem, size = 0x12000, scoped, tag = 'internal scratch']
  %s0 = inlined_call_operand.vmem [shape: f32[8,32], index: 0, kind: input, shape index: {}]
  %s1 = inlined_call_operand.hbm [shape: f32[32,128], index: 1, kind: input, shape index: {}]
  %s2 = inlined_call_operand.vmem [shape: f32[1,128], index: 2, kind: input, shape index: {}]
  %s3 = inlined_call_operand.vmem [shape: f32[128,128], index: 3, kind: input, shape index: {}]
  %s4 = inlined_call_operand.vmem [shape: f32[1,128], index: 4, kind: input, shape index: {}]
  %s5 = inlined_call_operand.vmem [shape: f32[128,16], index: 5, kind: input, shape index: {}]
  %s6 = inlined_call_operand.vmem [shape: f32[1,16], index: 6, kind: input, shape index: {}]
  %s7 = inlined_call_operand.hbm [shape: f32[8,16], index: 7, kind: output, shape index: {}]
  %s8 = sld [smem:[#allocation0]]
  $region42: #{tpu_custom_call.1} parent=0
    _
  %s10 = ssub.s32 1, %s8
  %s11 = scalar_select 0, %s10, %s8
  $region1: #{tpu_custom_call.1} parent=0
    #allocation2 [shape = 'u8[16384]{0}', space=vmem, size = 0x4000, scoped, tag = 'input window, operand 1, single buffered']
    #allocation3 [shape = 's32[1]{0}', space=sflag, size = 0x4, scoped, tag = 'scoped memory for tpu_custom_call.1']
    #allocation4 [shape = 's32[1]{0}', space=sflag, size = 0x4, scoped, tag = 'scoped memory for tpu_custom_call.1']
    #allocation5 [shape = 'u8[4096]{0}', space=vmem, size = 0x1000, scoped, tag = 'output window, operand 0, single buffered']
    %12 = vsyncpa [#allocation3], 0
    %13 = vsyncpa [#allocation4], 0
    // Predicated region
    $region2: #{tpu_custom_call.1} parent=1 // pred_check
      _
    $region3: #{tpu_custom_call.1} parent=1 // pred_check_branch
      %15 = sbr.rel (0) target = $region5
    $region4: #{tpu_custom_call.1} parent=1 // pred_region
      _
    $region5: #{tpu_custom_call.1} parent=1 // pred_fallthru
      _
    // Predicated region
    $region6: #{tpu_custom_call.1} parent=1 // pred_check
      _
    $region7: #{tpu_custom_call.1} parent=1 // pred_check_branch
      %17 = sbr.rel (0) target = $region9
    $region8: #{tpu_custom_call.1} parent=1 // pred_region
      %s19 = ssub.s32 512, 512
      %20 = vsyncadd [#allocation3], %s19
      %s21 = sshll.u32 [#allocation2], 4
      %s22 = int_to_ptr.vmem [resolvable:$true] %s21
      %27 = dma.hbm_to_vmem [thread:$0]  %s1, 512, %s22, [#allocation3], 128, 128, 8
    $region9: #{tpu_custom_call.1} parent=1 // pred_fallthru
      _
    // Predicated region
    $region10: #{tpu_custom_call.1} parent=1 // pred_check
      _
    $region11: #{tpu_custom_call.1} parent=1 // pred_check_branch
      %29 = sbr.rel (0) target = $region13
    $region12: #{tpu_custom_call.1} parent=1 // pred_region
      _
    $region13: #{tpu_custom_call.1} parent=1 // pred_fallthru
      _
    // Predicated region
    $region14: #{tpu_custom_call.1} parent=1 // pred_check
      _
    $region15: #{tpu_custom_call.1} parent=1 // pred_check_branch
      %31 = sbr.rel (0) target = $region17
    $region16: #{tpu_custom_call.1} parent=1 // pred_region
      _
    $region17: #{tpu_custom_call.1} parent=1 // pred_fallthru
      _
    // Predicated region
    $region18: #{tpu_custom_call.1} parent=1 // pred_check
      _
    $region19: #{tpu_custom_call.1} parent=1 // pred_check_branch
      %33 = sbr.rel (0) target = $region21
    $region20: #{tpu_custom_call.1} parent=1 // pred_region
      _
    $region21: #{tpu_custom_call.1} parent=1 // pred_fallthru
      _
    // Predicated region
    $region22: #{tpu_custom_call.1} parent=1 // pred_check
      _
    $region23: #{tpu_custom_call.1} parent=1 // pred_check_branch
      %35 = sbr.rel (0) target = $region25
    $region24: #{tpu_custom_call.1} parent=1 // pred_region
      _
    $region25: #{tpu_custom_call.1} parent=1 // pred_fallthru
      _
    // Predicated region
    $region26: #{tpu_custom_call.1} parent=1 // pred_check
      _
    $region27: #{tpu_custom_call.1} parent=1 // pred_check_branch
      %37 = sbr.rel (0) target = $region29
    $region28: #{tpu_custom_call.1} parent=1 // pred_region
      _
    $region29: #{tpu_custom_call.1} parent=1 // pred_fallthru
      _
    // Predicated region
    $region30: #{tpu_custom_call.1} parent=1 // pred_check
      _
    $region31: #{tpu_custom_call.1} parent=1 // pred_check_branch
      %39 = sbr.rel (0) target = $region33
    $region32: #{tpu_custom_call.1} parent=1 // pred_region
      %40 = dma.done [#allocation3], 512
    $region33: #{tpu_custom_call.1} parent=1 // pred_fallthru
      _
    %v41 = vld [vmem:[%s0] sm:$0xff]
    %v42 = vld [vmem:[#allocation2] sm:$0xff]
    %v43 = vld [vmem:[#allocation2 + $0x8] sm:$0xff]
    %v44 = vld [vmem:[#allocation2 + $0x10] sm:$0xff]
    %v45 = vld [vmem:[#allocation2 + $0x18] sm:$0xff]
    %v46 = vld [vmem:[%s2] sm:$0x1]
    %v48 = vlaneseq
    %v49 = vshrl.u32 %v48, 7
    %v50 = vsub.s32 0, %v49
    %v51 = vrot.slane %v46, %v50
    %vm53 = vcmask 261120
    %v55 = vsel %vm53, %v41, 0
    %57 = vmatprep.subr.mxu0 0.0
    %58 = vmatpush1.msra.mxu0 %v42
    %59 = vmatprep.subr.mxu0 0.0
    %60 = vmatpush1.msra.mxu0 %v43
    %61 = vmatprep.subr.mxu0 0.0
    %62 = vmatpush1.msra.mxu0 %v44
    %63 = vmatprep.subr.mxu0 0.0
    %64 = vmatpush1.msra.mxu0 %v45
    %65 = vmatprep.subr.mxu0 0.0
    %66 = vmatpush1.msra.mxu0 0.0
    %67 = vmatprep.subr.mxu0 0.0
    %68 = vmatpush1.msra.mxu0 0.0
    %69 = vmatprep.subr.mxu0 0.0
    %70 = vmatpush1.msra.mxu0 0.0
    %71 = vmatprep.subr.mxu0 0.0
    %72 = vmatpush1.msra.mxu0 0.0
    %73 = vmatprep.subr.mxu0 0.0
    %74 = vmatpush1.msra.mxu0 0.0
    %75 = vmatprep.subr.mxu0 0.0
    %76 = vmatpush1.msra.mxu0 0.0
    %77 = vmatprep.subr.mxu0 0.0
    %78 = vmatpush1.msra.mxu0 0.0
    %79 = vmatprep.subr.mxu0 0.0
    %80 = vmatpush1.msra.mxu0 0.0
    %81 = vmatprep.subr.mxu0 0.0
    %82 = vmatpush1.msra.mxu0 0.0
    %83 = vmatprep.subr.mxu0 0.0
    %84 = vmatpush1.msra.mxu0 0.0
    %85 = vmatprep.subr.mxu0 0.0
    %86 = vmatpush1.msra.mxu0 0.0
    %87 = vmatprep.subr.mxu0 0.0
    %88 = vmatpush1.msra.mxu0 0.0
    %89 = vmatprep.subr.mxu0 0.0
    %90 = vmatpush1.msra.mxu0 0.0
    %91 = vmatprep.subr.mxu0 0.0
    %92 = vmatpush1.msra.mxu0 0.0
    %93 = vmatprep.subr.mxu0 0.0
    %94 = vmatpush1.msra.mxu0 0.0
    %95 = vmatprep.subr.mxu0 0.0
    %96 = vmatpush1.msra.mxu0 0.0
    %97 = vmatprep.subr.mxu0 0.0
    %98 = vmatpush1.msra.mxu0 0.0
    %99 = vmatprep.subr.mxu0 0.0
    %100 = vmatpush1.msra.mxu0 0.0
    %101 = vmatprep.subr.mxu0 0.0
    %102 = vmatpush1.msra.mxu0 0.0
    %103 = vmatprep.subr.mxu0 0.0
    %104 = vmatpush1.msra.mxu0 0.0
    %105 = vmatprep.subr.mxu0 0.0
    %106 = vmatpush1.msra.mxu0 0.0
    %107 = vmatprep.subr.mxu0 0.0
    %108 = vmatpush1.msra.mxu0 0.0
    %109 = vmatprep.subr.mxu0 0.0
    %110 = vmatpush1.msra.mxu0 0.0
    %111 = vmatprep.subr.mxu0 0.0
    %112 = vmatpush1.msra.mxu0 0.0
    %113 = vmatprep.subr.mxu0 0.0
    %114 = vmatpush1.msra.mxu0 0.0
    %115 = vmatprep.subr.mxu0 0.0
    %116 = vmatpush1.msra.mxu0 0.0
    %117 = vmatprep.subr.mxu0 0.0
    %118 = vmatpush1.msra.mxu0 0.0
    %119 = vmatprep.subr.mxu0 0.0
    %120 = vmatpush1.msra.mxu0 0.0
    %121 = vmatprep.mubr.f32.mxu0 0.0
    %122 = vmatmul.mubr.f32.gmra.mrb[0].mxu0 %v55
    %v123 = vpop.f32.mrb[0].mxu0
    %v124 = vadd.f32 %v51, %v123
    %v125 = vpop.f32.mrb[0].mxu0
    %126 = vdwg.mxu0
    %v127 = vmax.f32 %v124, 0.0
    %v128 = vld [vmem:[%s3] sm:$0xff]
    %v129 = vld [vmem:[%s3 + $0x8] sm:$0xff]
    %v130 = vld [vmem:[%s3 + $0x10] sm:$0xff]
    %v131 = vld [vmem:[%s3 + $0x18] sm:$0xff]
    %v132 = vld [vmem:[%s3 + $0x20] sm:$0xff]
    %v133 = vld [vmem:[%s3 + $0x28] sm:$0xff]
    %v134 = vld [vmem:[%s3 + $0x30] sm:$0xff]
    %v135 = vld [vmem:[%s3 + $0x38] sm:$0xff]
    %v136 = vld [vmem:[%s3 + $0x40] sm:$0xff]
    %v137 = vld [vmem:[%s3 + $0x48] sm:$0xff]
    %v138 = vld [vmem:[%s3 + $0x50] sm:$0xff]
    %v139 = vld [vmem:[%s3 + $0x58] sm:$0xff]
    %v140 = vld [vmem:[%s3 + $0x60] sm:$0xff]
    %v141 = vld [vmem:[%s3 + $0x68] sm:$0xff]
    %v142 = vld [vmem:[%s3 + $0x70] sm:$0xff]
    %v143 = vld [vmem:[%s3 + $0x78] sm:$0xff]
    %v144 = vld [vmem:[%s4] sm:$0x1]
    %v146 = vlaneseq
    %v147 = vshrl.u32 %v146, 7
    %v148 = vsub.s32 0, %v147
    %v149 = vrot.slane %v144, %v148
    %151 = vmatprep.subr.mxu0 0.0
    %152 = vmatpush1.msra.mxu0 %v128
    %153 = vmatprep.subr.mxu0 0.0
    %154 = vmatpush1.msra.mxu0 %v129
    %155 = vmatprep.subr.mxu0 0.0
    %156 = vmatpush1.msra.mxu0 %v130
    %157 = vmatprep.subr.mxu0 0.0
    %158 = vmatpush1.msra.mxu0 %v131
    %159 = vmatprep.subr.mxu0 0.0
    %160 = vmatpush1.msra.mxu0 %v132
    %161 = vmatprep.subr.mxu0 0.0
    %162 = vmatpush1.msra.mxu0 %v133
    %163 = vmatprep.subr.mxu0 0.0
    %164 = vmatpush1.msra.mxu0 %v134
    %165 = vmatprep.subr.mxu0 0.0
    %166 = vmatpush1.msra.mxu0 %v135
    %167 = vmatprep.subr.mxu0 0.0
    %168 = vmatpush1.msra.mxu0 %v136
    %169 = vmatprep.subr.mxu0 0.0
    %170 = vmatpush1.msra.mxu0 %v137
    %171 = vmatprep.subr.mxu0 0.0
    %172 = vmatpush1.msra.mxu0 %v138
    %173 = vmatprep.subr.mxu0 0.0
    %174 = vmatpush1.msra.mxu0 %v139
    %175 = vmatprep.subr.mxu0 0.0
    %176 = vmatpush1.msra.mxu0 %v140
    %177 = vmatprep.subr.mxu0 0.0
    %178 = vmatpush1.msra.mxu0 %v141
    %179 = vmatprep.subr.mxu0 0.0
    %180 = vmatpush1.msra.mxu0 %v142
    %181 = vmatprep.subr.mxu0 0.0
    %182 = vmatpush1.msra.mxu0 %v143
    %183 = vmatprep.subr.mxu0 0.0
    %184 = vmatpush1.msra.mxu0 0.0
    %185 = vmatprep.subr.mxu0 0.0
    %186 = vmatpush1.msra.mxu0 0.0
    %187 = vmatprep.subr.mxu0 0.0
    %188 = vmatpush1.msra.mxu0 0.0
    %189 = vmatprep.subr.mxu0 0.0
    %190 = vmatpush1.msra.mxu0 0.0
    %191 = vmatprep.subr.mxu0 0.0
    %192 = vmatpush1.msra.mxu0 0.0
    %193 = vmatprep.subr.mxu0 0.0
    %194 = vmatpush1.msra.mxu0 0.0
    %195 = vmatprep.subr.mxu0 0.0
    %196 = vmatpush1.msra.mxu0 0.0
    %197 = vmatprep.subr.mxu0 0.0
    %198 = vmatpush1.msra.mxu0 0.0
    %199 = vmatprep.subr.mxu0 0.0
    %200 = vmatpush1.msra.mxu0 0.0
    %201 = vmatprep.subr.mxu0 0.0
    %202 = vmatpush1.msra.mxu0 0.0
    %203 = vmatprep.subr.mxu0 0.0
    %204 = vmatpush1.msra.mxu0 0.0
    %205 = vmatprep.subr.mxu0 0.0
    %206 = vmatpush1.msra.mxu0 0.0
    %207 = vmatprep.subr.mxu0 0.0
    %208 = vmatpush1.msra.mxu0 0.0
    %209 = vmatprep.subr.mxu0 0.0
    %210 = vmatpush1.msra.mxu0 0.0
    %211 = vmatprep.subr.mxu0 0.0
    %212 = vmatpush1.msra.mxu0 0.0
    %213 = vmatprep.subr.mxu0 0.0
    %214 = vmatpush1.msra.mxu0 0.0
    %215 = vmatprep.mubr.f32.mxu0 0.0
    %216 = vmatmul.mubr.f32.gmra.mrb[0].mxu0 %v127
    %v217 = vpop.f32.mrb[0].mxu0
    %v218 = vadd.f32 %v149, %v217
    %v219 = vpop.f32.mrb[0].mxu0
    %220 = vdwg.mxu0
    %v221 = vmax.f32 %v218, 0.0
    %v222 = vld [vmem:[%s5] sm:$0xff]
    %v223 = vld [vmem:[%s5 + $0x8] sm:$0xff]
    %v224 = vld [vmem:[%s5 + $0x10] sm:$0xff]
    %v225 = vld [vmem:[%s5 + $0x18] sm:$0xff]
    %v226 = vld [vmem:[%s5 + $0x20] sm:$0xff]
    %v227 = vld [vmem:[%s5 + $0x28] sm:$0xff]
    %v228 = vld [vmem:[%s5 + $0x30] sm:$0xff]
    %v229 = vld [vmem:[%s5 + $0x38] sm:$0xff]
    %v230 = vld [vmem:[%s5 + $0x40] sm:$0xff]
    %v231 = vld [vmem:[%s5 + $0x48] sm:$0xff]
    %v232 = vld [vmem:[%s5 + $0x50] sm:$0xff]
    %v233 = vld [vmem:[%s5 + $0x58] sm:$0xff]
    %v234 = vld [vmem:[%s5 + $0x60] sm:$0xff]
    %v235 = vld [vmem:[%s5 + $0x68] sm:$0xff]
    %v236 = vld [vmem:[%s5 + $0x70] sm:$0xff]
    %v237 = vld [vmem:[%s5 + $0x78] sm:$0xff]
    %v238 = vld [vmem:[%s6] sm:$0x1]
    %v240 = vlaneseq
    %v241 = vshrl.u32 %v240, 7
    %v242 = vsub.s32 0, %v241
    %v243 = vrot.slane %v238, %v242
    %245 = vmatprep.subr.mxu0 0.0
    %246 = vmatpush1.msra.mxu0 %v222
    %247 = vmatprep.subr.mxu0 0.0
    %248 = vmatpush1.msra.mxu0 %v223
    %249 = vmatprep.subr.mxu0 0.0
    %250 = vmatpush1.msra.mxu0 %v224
    %251 = vmatprep.subr.mxu0 0.0
    %252 = vmatpush1.msra.mxu0 %v225
    %253 = vmatprep.subr.mxu0 0.0
    %254 = vmatpush1.msra.mxu0 %v226
    %255 = vmatprep.subr.mxu0 0.0
    %256 = vmatpush1.msra.mxu0 %v227
    %257 = vmatprep.subr.mxu0 0.0
    %258 = vmatpush1.msra.mxu0 %v228
    %259 = vmatprep.subr.mxu0 0.0
    %260 = vmatpush1.msra.mxu0 %v229
    %261 = vmatprep.subr.mxu0 0.0
    %262 = vmatpush1.msra.mxu0 %v230
    %263 = vmatprep.subr.mxu0 0.0
    %264 = vmatpush1.msra.mxu0 %v231
    %265 = vmatprep.subr.mxu0 0.0
    %266 = vmatpush1.msra.mxu0 %v232
    %267 = vmatprep.subr.mxu0 0.0
    %268 = vmatpush1.msra.mxu0 %v233
    %269 = vmatprep.subr.mxu0 0.0
    %270 = vmatpush1.msra.mxu0 %v234
    %271 = vmatprep.subr.mxu0 0.0
    %272 = vmatpush1.msra.mxu0 %v235
    %273 = vmatprep.subr.mxu0 0.0
    %274 = vmatpush1.msra.mxu0 %v236
    %275 = vmatprep.subr.mxu0 0.0
    %276 = vmatpush1.msra.mxu0 %v237
    %277 = vmatprep.subr.mxu0 0.0
    %278 = vmatpush1.msra.mxu0 0.0
    %279 = vmatprep.subr.mxu0 0.0
    %280 = vmatpush1.msra.mxu0 0.0
    %281 = vmatprep.subr.mxu0 0.0
    %282 = vmatpush1.msra.mxu0 0.0
    %283 = vmatprep.subr.mxu0 0.0
    %284 = vmatpush1.msra.mxu0 0.0
    %285 = vmatprep.subr.mxu0 0.0
    %286 = vmatpush1.msra.mxu0 0.0
    %287 = vmatprep.subr.mxu0 0.0
    %288 = vmatpush1.msra.mxu0 0.0
    %289 = vmatprep.subr.mxu0 0.0
    %290 = vmatpush1.msra.mxu0 0.0
    %291 = vmatprep.subr.mxu0 0.0
    %292 = vmatpush1.msra.mxu0 0.0
    %293 = vmatprep.subr.mxu0 0.0
    %294 = vmatpush1.msra.mxu0 0.0
    %295 = vmatprep.subr.mxu0 0.0
    %296 = vmatpush1.msra.mxu0 0.0
    %297 = vmatprep.subr.mxu0 0.0
    %298 = vmatpush1.msra.mxu0 0.0
    %299 = vmatprep.subr.mxu0 0.0
    %300 = vmatpush1.msra.mxu0 0.0
    %301 = vmatprep.subr.mxu0 0.0
    %302 = vmatpush1.msra.mxu0 0.0
    %303 = vmatprep.subr.mxu0 0.0
    %304 = vmatpush1.msra.mxu0 0.0
    %305 = vmatprep.subr.mxu0 0.0
    %306 = vmatpush1.msra.mxu0 0.0
    %307 = vmatprep.subr.mxu0 0.0
    %308 = vmatpush1.msra.mxu0 0.0
    %309 = vmatprep.mubr.f32.mxu0 0.0
    %310 = vmatmul.mubr.f32.gmra.mrb[0].mxu0 %v221
    %v311 = vpop.f32.mrb[0].mxu0
    %v312 = vadd.f32 %v243, %v311
    %v313 = vpop.f32.mrb[0].mxu0
    %314 = vdwg.mxu0
    %vm315 = vcmask 130048
    %316 = vst.msk [vmem:[#allocation5] sm:$0xff] %vm315, %v312
    // Predicated region
    $region34: #{tpu_custom_call.1} parent=1 // pred_check
      _
    $region35: #{tpu_custom_call.1} parent=1 // pred_check_branch
      %318 = sbr.rel (0) target = $region37
    $region36: #{tpu_custom_call.1} parent=1 // pred_region
      %s320 = ssub.s32 128, 128
      %321 = vsyncadd [#allocation4], %s320
      %s323 = sshll.u32 [#allocation5], 4
      %s324 = int_to_ptr.vmem [resolvable:$true] %s323
      %326 = dma.vmem_to_hbm [thread:$0]  %s324, 128, %s7, [#allocation4]
    $region37: #{tpu_custom_call.1} parent=1 // pred_fallthru
      _
    // Predicated region
    $region38: #{tpu_custom_call.1} parent=1 // pred_check
      _
    $region39: #{tpu_custom_call.1} parent=1 // pred_check_branch
      %328 = sbr.rel (0) target = $region41
    $region40: #{tpu_custom_call.1} parent=1 // pred_region
      %329 = dma.done [#allocation4], 128
    $region41: #{tpu_custom_call.1} parent=1 // pred_fallthru
      _
    %330 = vsyncpa [#allocation3], 1
    %331 = vsyncpa [#allocation4], 1

</llo_original>
